<compile_context>
chip_gen: v7x
topology: tpu7x:2x2x1
jax: 0.10.0
libtpu: 0.0.40
codegen_flags: <defaults>
</compile_context>

<pallas_src>
import functools
import math

import jax
import jax.numpy as jnp
from jax.experimental import pallas as pl
from jax.experimental.pallas import tpu as pltpu

_PAD = 128                 # lane width all feature dims are padded to
_TILE_B_MAX = 256          # max batch rows per grid step (tiny VMEM footprint)
_LOG_SQRT_2PI = 0.5 * math.log(2.0 * math.pi)


def _round_up(x, m):
    return ((x + m - 1) // m) * m


def _actor_kernel(flag_ref, xa_ref, w_ref, b_ref, out_ref):
    """mu = (tanh(tanh(obs@W1+b1)@W2+b2))@W3+b3.

    If flag != 0: also logp = sum_a Normal(mu, exp(log_std)).log_prob(act),
    written into lane 127 of the dense output slab.
    """
    obs = xa_ref[:, :_PAD]                                    # (TB, 128) padded obs

    h1 = jnp.tanh(
        jnp.dot(obs, w_ref[0], preferred_element_type=jnp.float32) + b_ref[0:1, :])
    h2 = jnp.tanh(
        jnp.dot(h1, w_ref[1], preferred_element_type=jnp.float32) + b_ref[1:2, :])
    mu = jnp.dot(h2, w_ref[2], preferred_element_type=jnp.float32) + b_ref[2:3, :]
    # Padded lanes of mu are exactly 0 (zero-padded weights / biases).

    @pl.when(flag_ref[0] == 0)
    def _():
        out_ref[...] = mu                                     # dense 128-lane store

    @pl.when(flag_ref[0] != 0)
    def _():
        act = xa_ref[:, _PAD:]                                # (TB, 128) padded act
        log_std = b_ref[3:4, :]                               # (1, 128)
        valid = b_ref[4:5, :]                                 # 1.0 for lanes < act_dim
        z = (act - mu) * jnp.exp(-log_std)
        logp_elem = (-0.5 * z * z - log_std - _LOG_SQRT_2PI) * valid
        logp = jnp.sum(logp_elem, axis=-1, keepdims=True)     # (TB, 1)
        lane = jax.lax.broadcasted_iota(jnp.int32, mu.shape, 1)
        # Pack logp into the (unused) last lane -> still one dense store.
        out_ref[...] = jnp.where(lane == _PAD - 1, logp, mu)


@functools.partial(jax.jit, static_argnames=("act_dim", "tile_b", "compute_logp"))
def _forward_padded(w_slab, b_slab, obs, act, *, act_dim, tile_b, compute_logp):
    B, obs_dim = obs.shape
    b_pad = _round_up(B, tile_b)

    # One lane-aligned input slab: obs in lanes [0,128), act in lanes [128,256).
    xa = jnp.zeros((b_pad, 2 * _PAD), jnp.float32)
    xa = xa.at[:B, :obs_dim].set(obs.astype(jnp.float32))
    if act is not None:
        xa = xa.at[:B, _PAD:_PAD + act.shape[1]].set(act.astype(jnp.float32))

    flag = jnp.array([1 if compute_logp else 0], jnp.int32)
    grid = (b_pad // tile_b,)

    out = pl.pallas_call(
        _actor_kernel,
        out_shape=jax.ShapeDtypeStruct((b_pad, _PAD), jnp.float32),
        grid_spec=pltpu.PrefetchScalarGridSpec(
            num_scalar_prefetch=1,
            grid=grid,
            in_specs=[
                # batch-tiled obs|act slab
                pl.BlockSpec((tile_b, 2 * _PAD), lambda i, flag: (i, 0)),
                # weights / biases stay VMEM-resident across all grid steps
                pl.BlockSpec((3, _PAD, _PAD), lambda i, flag: (0, 0, 0)),
                pl.BlockSpec((8, _PAD), lambda i, flag: (0, 0)),
            ],
            out_specs=pl.BlockSpec((tile_b, _PAD), lambda i, flag: (i, 0)),
        ),
        compiler_params=pltpu.CompilerParams(
            dimension_semantics=("parallel",)),     # lets v7x use both TensorCores
    )(flag, xa, w_slab, b_slab)

    mu = out[:B, :act_dim]
    logp = out[:B, _PAD - 1]
    return mu, logp


def init_actor(key, obs_dim, hidden_sizes, act_dim, log_std_scale=-0.5):
    """Init mimicking torch.nn.Linear (U(-1/sqrt(fan_in), +1/sqrt(fan_in))) + pack slabs."""
    assert len(hidden_sizes) == 2, "kernel packs exactly 3 Linear layers (2 hidden)"
    sizes = [obs_dim] + list(hidden_sizes) + [act_dim]
    assert max(sizes) <= _PAD and act_dim < _PAD, "feature dims must fit in 128 lanes"

    raw = []
    for j in range(len(sizes) - 1):
        fan_in, fan_out = sizes[j], sizes[j + 1]
        key, kw, kb = jax.random.split(key, 3)
        bound = 1.0 / math.sqrt(fan_in)
        w = jax.random.uniform(kw, (fan_in, fan_out), jnp.float32, -bound, bound)
        b = jax.random.uniform(kb, (fan_out,), jnp.float32, -bound, bound)
        raw.append((w, b))
    log_std = jnp.full((act_dim,), log_std_scale, dtype=jnp.float32)

    # Packed, zero-padded weight slab (3, 128, 128).
    w_slab = jnp.zeros((3, _PAD, _PAD), jnp.float32)
    for j, (w, _) in enumerate(raw):
        w_slab = w_slab.at[j, :w.shape[0], :w.shape[1]].set(w)

    # Bias / log_std / validity-mask slab (8, 128).
    b_slab = jnp.zeros((8, _PAD), jnp.float32)
    for j, (_, b) in enumerate(raw):
        b_slab = b_slab.at[j, :b.shape[0]].set(b)
    b_slab = b_slab.at[3, :act_dim].set(log_std)
    b_slab = b_slab.at[4, :act_dim].set(1.0)      # mask for log_prob sum over act_dim

    return {
        "w_slab": w_slab,
        "b_slab": b_slab,
        "log_std": log_std,
        "std": jnp.exp(log_std),                  # hoisted: computed once at init
        "raw": raw,
        "obs_dim": obs_dim,
        "act_dim": act_dim,
    }


def mlp_gaussian_actor_forward(actor, obs, act=None, deterministic=False):
    """JAX/Pallas equivalent of MLPGaussianActor.forward.

    Returns:
      deterministic=True  -> (mu, None)
      deterministic=False -> ((mu, std), logp_a)   # (mu, std) stands in for Normal(mu, std)
    """
    B = obs.shape[0]
    act_dim = actor["act_dim"]
    tile_b = min(_TILE_B_MAX, _round_up(B, 8))
    compute_logp = (act is not None) and (not deterministic)

    mu, logp = _forward_padded(
        actor["w_slab"], actor["b_slab"], obs,
        act if compute_logp else None,
        act_dim=act_dim, tile_b=tile_b, compute_logp=compute_logp)

    if deterministic:
        return mu, None
    logp_a = logp if compute_logp else None
    return (mu, actor["std"]), logp_a


def _reference_forward(actor, obs, act):
    """Pure-JAX reference for verification."""
    (w1, b1), (w2, b2), (w3, b3) = actor["raw"]
    log_std = actor["log_std"]
    h1 = jnp.tanh(obs @ w1 + b1)
    h2 = jnp.tanh(h1 @ w2 + b2)
    mu = h2 @ w3 + b3
    std = jnp.exp(log_std)
    logp = (-0.5 * ((act - mu) / std) ** 2 - log_std - _LOG_SQRT_2PI).sum(axis=-1)
    return mu, logp


if __name__ == "__main__":
    B, OBS_DIM, ACT_DIM = 8, 16, 4
    HIDDEN = (32, 32)

    key = jax.random.PRNGKey(0)
    kp, ko, ka, ko2, ka2 = jax.random.split(key, 5)

    actor = init_actor(kp, OBS_DIM, HIDDEN, ACT_DIM)
    obs = jax.random.normal(ko, (B, OBS_DIM), jnp.float32)
    act = jax.random.normal(ka, (B, ACT_DIM), jnp.float32)

    # Stochastic path with log-prob.
    (mu, std), logp_a = mlp_gaussian_actor_forward(actor, obs, act=act)
    jax.block_until_ready((mu, std, logp_a))

    # Deterministic path (mu only; log-prob tail skipped in-kernel via pl.when).
    mu_det, none_val = mlp_gaussian_actor_forward(actor, obs, deterministic=True)
    jax.block_until_ready(mu_det)
    assert none_val is None

    # Distribution-only path (act=None).
    (mu_pi, std_pi), logp_none = mlp_gaussian_actor_forward(actor, obs)
    jax.block_until_ready((mu_pi, std_pi))
    assert logp_none is None

    mu_ref, logp_ref = _reference_forward(actor, obs, act)
    assert jnp.allclose(mu, mu_ref, atol=1e-5, rtol=1e-5)
    assert jnp.allclose(mu_det, mu_ref, atol=1e-5, rtol=1e-5)
    assert jnp.allclose(mu_pi, mu_ref, atol=1e-5, rtol=1e-5)
    assert jnp.allclose(logp_a, logp_ref, atol=1e-5, rtol=1e-5)
    assert jnp.allclose(std, jnp.exp(actor["log_std"]))

    # Larger batch exercising a multi-step grid (tile_b=256, grid=(2,)).
    B2 = 300
    obs2 = jax.random.normal(ko2, (B2, OBS_DIM), jnp.float32)
    act2 = jax.random.normal(ka2, (B2, ACT_DIM), jnp.float32)
    (mu2, _), logp2 = mlp_gaussian_actor_forward(actor, obs2, act=act2)
    jax.block_until_ready((mu2, logp2))
    mu2_ref, logp2_ref = _reference_forward(actor, obs2, act2)
    assert jnp.allclose(mu2, mu2_ref, atol=1e-5, rtol=1e-5)
    assert jnp.allclose(logp2, logp2_ref, atol=1e-5, rtol=1e-5)

    print("KERNEL_OK")
</pallas_src>

<mosaic_0001>
module attributes {stable_mosaic.version = 11 : i64} {
  func.func @_actor_kernel(%arg0: i32, %arg1: memref<1xi32, #tpu.memory_space<smem>>, %arg2: memref<8x256xf32, #tpu.memory_space<vmem>>, %arg3: memref<3x128x128xf32, #tpu.memory_space<vmem>>, %arg4: memref<8x128xf32, #tpu.memory_space<vmem>>, %arg5: memref<8x128xf32, #tpu.memory_space<vmem>>) attributes {dimension_semantics = [#tpu.dimension_semantics<parallel>], iteration_bounds = array<i64: 1>, scalar_prefetch = 1 : i64, scratch_operands = 0 : i64, tpu.core_type = #tpu.core_type<tc>, window_params = [{transform_indices = @transform_0, window_bounds = array<i64: 8, 256>}, {pipeline_mode = #tpu.pipeline_mode<synchronous>, transform_indices = @transform_1, window_bounds = array<i64: 3, 128, 128>}, {pipeline_mode = #tpu.pipeline_mode<synchronous>, transform_indices = @transform_2, window_bounds = array<i64: 8, 128>}, {transform_indices = @transform_3, window_bounds = array<i64: 8, 128>}]} {
    %c0 = arith.constant 0 : index
    %c0_0 = arith.constant 0 : index
    %0 = vector.load %arg2[%c0, %c0_0] : memref<8x256xf32, #tpu.memory_space<vmem>>, vector<8x128xf32>
    %c0_1 = arith.constant 0 : index
    %c0_2 = arith.constant 0 : index
    %c0_3 = arith.constant 0 : index
    %1 = vector.load %arg3[%c0_1, %c0_2, %c0_3] : memref<3x128x128xf32, #tpu.memory_space<vmem>>, vector<1x128x128xf32>
    %2 = vector.shape_cast %1 : vector<1x128x128xf32> to vector<128x128xf32>
    %cst = arith.constant dense<0.000000e+00> : vector<8x128xf32>
    %3 = tpu.matmul %0, %2, %cst {dimension_numbers = #tpu.dot_dimension_numbers<[1], [0], [0], [1], [0, 0, 1, 1], [], []>} : vector<8x128xf32>, vector<128x128xf32>, vector<8x128xf32> -> vector<8x128xf32>
    %c0_4 = arith.constant 0 : index
    %c0_5 = arith.constant 0 : index
    %4 = vector.load %arg4[%c0_4, %c0_5] : memref<8x128xf32, #tpu.memory_space<vmem>>, vector<1x128xf32>
    %5 = vector.broadcast %4 : vector<1x128xf32> to vector<8x128xf32>
    %6 = arith.addf %3, %5 : vector<8x128xf32>
    %7 = math.tanh %6 : vector<8x128xf32>
    %c1 = arith.constant 1 : index
    %c0_6 = arith.constant 0 : index
    %c0_7 = arith.constant 0 : index
    %8 = vector.load %arg3[%c1, %c0_6, %c0_7] : memref<3x128x128xf32, #tpu.memory_space<vmem>>, vector<1x128x128xf32>
    %9 = vector.shape_cast %8 : vector<1x128x128xf32> to vector<128x128xf32>
    %cst_8 = arith.constant dense<0.000000e+00> : vector<8x128xf32>
    %10 = tpu.matmul %7, %9, %cst_8 {dimension_numbers = #tpu.dot_dimension_numbers<[1], [0], [0], [1], [0, 0, 1, 1], [], []>} : vector<8x128xf32>, vector<128x128xf32>, vector<8x128xf32> -> vector<8x128xf32>
    %c1_9 = arith.constant 1 : index
    %c0_10 = arith.constant 0 : index
    %11 = vector.load %arg4[%c1_9, %c0_10] : memref<8x128xf32, #tpu.memory_space<vmem>>, vector<1x128xf32>
    %12 = vector.broadcast %11 : vector<1x128xf32> to vector<8x128xf32>
    %13 = arith.addf %10, %12 : vector<8x128xf32>
    %14 = math.tanh %13 : vector<8x128xf32>
    %c2 = arith.constant 2 : index
    %c0_11 = arith.constant 0 : index
    %c0_12 = arith.constant 0 : index
    %15 = vector.load %arg3[%c2, %c0_11, %c0_12] : memref<3x128x128xf32, #tpu.memory_space<vmem>>, vector<1x128x128xf32>
    %16 = vector.shape_cast %15 : vector<1x128x128xf32> to vector<128x128xf32>
    %cst_13 = arith.constant dense<0.000000e+00> : vector<8x128xf32>
    %17 = tpu.matmul %14, %16, %cst_13 {dimension_numbers = #tpu.dot_dimension_numbers<[1], [0], [0], [1], [0, 0, 1, 1], [], []>} : vector<8x128xf32>, vector<128x128xf32>, vector<8x128xf32> -> vector<8x128xf32>
    %c2_14 = arith.constant 2 : index
    %c0_15 = arith.constant 0 : index
    %18 = vector.load %arg4[%c2_14, %c0_15] : memref<8x128xf32, #tpu.memory_space<vmem>>, vector<1x128xf32>
    %19 = vector.broadcast %18 : vector<1x128xf32> to vector<8x128xf32>
    %20 = arith.addf %17, %19 : vector<8x128xf32>
    %c0_16 = arith.constant 0 : index
    %21 = memref.load %arg1[%c0_16] : memref<1xi32, #tpu.memory_space<smem>>
    %c0_i32 = arith.constant 0 : i32
    %22 = arith.cmpi eq, %21, %c0_i32 : i32
    %23 = arith.extui %22 : i1 to i32
    %c0_i32_17 = arith.constant 0 : i32
    %24 = arith.cmpi ne, %23, %c0_i32_17 : i32
    scf.if %24 {
      %c0_21 = arith.constant 0 : index
      %c0_22 = arith.constant 0 : index
      %29 = vector.load %arg5[%c0_21, %c0_22] : memref<8x128xf32, #tpu.memory_space<vmem>>, vector<8x128xf32>
      tpu.vector_store %arg5[%c0_21, %c0_22], %20 {strides = array<i32>} : memref<8x128xf32, #tpu.memory_space<vmem>>, vector<8x128xf32>,
    } else {
    }
    %c0_18 = arith.constant 0 : index
    %25 = memref.load %arg1[%c0_18] : memref<1xi32, #tpu.memory_space<smem>>
    %c0_i32_19 = arith.constant 0 : i32
    %26 = arith.cmpi ne, %25, %c0_i32_19 : i32
    %27 = arith.extui %26 : i1 to i32
    %c0_i32_20 = arith.constant 0 : i32
    %28 = arith.cmpi ne, %27, %c0_i32_20 : i32
    scf.if %28 {
      %c0_21 = arith.constant 0 : index
      %c128 = arith.constant 128 : index
      %29 = vector.load %arg2[%c0_21, %c128] : memref<8x256xf32, #tpu.memory_space<vmem>>, vector<8x128xf32>
      %c3 = arith.constant 3 : index
      %c0_22 = arith.constant 0 : index
      %30 = vector.load %arg4[%c3, %c0_22] : memref<8x128xf32, #tpu.memory_space<vmem>>, vector<1x128xf32>
      %c4 = arith.constant 4 : index
      %c0_23 = arith.constant 0 : index
      %31 = vector.load %arg4[%c4, %c0_23] : memref<8x128xf32, #tpu.memory_space<vmem>>, vector<1x128xf32>
      %32 = arith.subf %29, %20 : vector<8x128xf32>
      %cst_24 = arith.constant 0.000000e+00 : f32
      %33 = vector.broadcast %cst_24 : f32 to vector<1x128xf32>
      %34 = arith.subf %33, %30 : vector<1x128xf32>
      %35 = math.exp %34 : vector<1x128xf32>
      %36 = vector.broadcast %35 : vector<1x128xf32> to vector<8x128xf32>
      %37 = arith.mulf %32, %36 : vector<8x128xf32>
      %cst_25 = arith.constant -5.000000e-01 : f32
      %38 = vector.broadcast %cst_25 : f32 to vector<8x128xf32>
      %39 = arith.mulf %38, %37 : vector<8x128xf32>
      %40 = arith.mulf %39, %37 : vector<8x128xf32>
      %41 = vector.broadcast %30 : vector<1x128xf32> to vector<8x128xf32>
      %42 = arith.subf %40, %41 : vector<8x128xf32>
      %cst_26 = arith.constant 0.918938517 : f32
      %43 = vector.broadcast %cst_26 : f32 to vector<8x128xf32>
      %44 = arith.subf %42, %43 : vector<8x128xf32>
      %45 = vector.broadcast %31 : vector<1x128xf32> to vector<8x128xf32>
      %46 = arith.mulf %44, %45 : vector<8x128xf32>
      %cst_27 = arith.constant dense<0.000000e+00> : vector<8xf32>
      %47 = vector.multi_reduction <add>, %46, %cst_27 [1] : vector<8x128xf32> to vector<8xf32>
      %48 = vector.shape_cast %47 : vector<8xf32> to vector<8x1xf32>
      %49 = tpu.iota {dimensions = array<i32: 1>} : vector<8x128xi32>
      %c127_i32 = arith.constant 127 : i32
      %50 = vector.broadcast %c127_i32 : i32 to vector<8x128xi32>
      %51 = arith.cmpi eq, %49, %50 : vector<8x128xi32>
      %52 = vector.shape_cast %48 : vector<8x1xf32> to vector<8x1xf32>
      %53 = vector.broadcast %52 : vector<8x1xf32> to vector<8x128xf32>
      %54 = arith.select %51, %53, %20 : vector<8x128xi1>, vector<8x128xf32>
      %c0_28 = arith.constant 0 : index
      %c0_29 = arith.constant 0 : index
      %55 = vector.load %arg5[%c0_28, %c0_29] : memref<8x128xf32, #tpu.memory_space<vmem>>, vector<8x128xf32>
      tpu.vector_store %arg5[%c0_28, %c0_29], %54 {strides = array<i32>} : memref<8x128xf32, #tpu.memory_space<vmem>>, vector<8x128xf32>,
    } else {
    }
    return
  }
  func.func @transform_0(%arg0: i32, %arg1: memref<1xi32, #tpu.memory_space<smem>>) -> (i32, i32) {
    %c0_i32 = arith.constant 0 : i32
    %c0_i32_0 = arith.constant 0 : i32
    return %arg0, %c0_i32 : i32, i32
  }
  func.func @transform_1(%arg0: i32, %arg1: memref<1xi32, #tpu.memory_space<smem>>) -> (i32, i32, i32) {
    %c0_i32 = arith.constant 0 : i32
    %c0_i32_0 = arith.constant 0 : i32
    %c0_i32_1 = arith.constant 0 : i32
    %c0_i32_2 = arith.constant 0 : i32
    return %c0_i32, %c0_i32_0, %c0_i32_1 : i32, i32, i32
  }
  func.func @transform_2(%arg0: i32, %arg1: memref<1xi32, #tpu.memory_space<smem>>) -> (i32, i32) {
    %c0_i32 = arith.constant 0 : i32
    %c0_i32_0 = arith.constant 0 : i32
    %c0_i32_1 = arith.constant 0 : i32
    return %c0_i32, %c0_i32_0 : i32, i32
  }
  func.func @transform_3(%arg0: i32, %arg1: memref<1xi32, #tpu.memory_space<smem>>) -> (i32, i32) {
    %c0_i32 = arith.constant 0 : i32
    %c0_i32_0 = arith.constant 0 : i32
    return %arg0, %c0_i32 : i32, i32
  }
}

</mosaic_0001>

<llo_original>
// kernel: _forward_padded.1
$region0: #{_forward_padded.1}
  #allocation0 [shape = 'u32[]', space=smem, size = 0x4, offset = 0x4, fixed_abs, tag = 'smem constant byte address 0x4 - core index']
  #allocation1 [shape = 'u32[144,128]{1,0:T(1,128)}', space=vmem, size = 0x12000, scoped, tag = 'internal scratch']
  #allocation2 [shape = 's32[1]{0}', space=sflag, size = 0x4, scoped, tag = 'scoped memory for _forward_padded.1']
  #allocation3 [shape = 's32[1]{0:T(128)S(6)}', space=smem, size = 0x200, scoped, tag = 'prefetched SMEM operand 0']
  %s0 = inlined_call_operand.<no memory space> [shape: s32[1], index: 0, kind: input, shape index: {}]
  %s1 = inlined_call_operand.vmem [shape: f32[8,256], index: 1, kind: input, shape index: {}]
  %s2 = inlined_call_operand.hbm [shape: f32[3,128,128], index: 2, kind: input, shape index: {}]
  %s3 = inlined_call_operand.vmem [shape: f32[8,128], index: 3, kind: input, shape index: {}]
  %s4 = inlined_call_operand.vmem [shape: f32[8,128], index: 4, kind: output, shape index: {}]
  %s5 = sld [smem:[#allocation0]]
  $region34: #{_forward_padded.1} parent=0
    _
  %s7 = ssub.s32 1, %s5
  %s8 = scalar_select 0, %s7, %s5
  %9 = sst [smem:[#allocation3]] %s0
  $region1: #{_forward_padded.1} parent=0
    #allocation4 [shape = 'u8[196608]{0}', space=vmem, size = 0x30000, scoped, tag = 'input window, operand 2, single buffered']
    #allocation5 [shape = 's32[1]{0}', space=sflag, size = 0x4, scoped, tag = 'scoped memory for _forward_padded.1']
    %10 = vsyncpa [#allocation5], 0
    // Predicated region
    $region2: #{_forward_padded.1} parent=1 // pred_check
      _
    $region3: #{_forward_padded.1} parent=1 // pred_check_branch
      %12 = sbr.rel (0) target = $region5
    $region4: #{_forward_padded.1} parent=1 // pred_region
      _
    $region5: #{_forward_padded.1} parent=1 // pred_fallthru
      _
    // Predicated region
    $region6: #{_forward_padded.1} parent=1 // pred_check
      _
    $region7: #{_forward_padded.1} parent=1 // pred_check_branch
      %14 = sbr.rel (0) target = $region9
    $region8: #{_forward_padded.1} parent=1 // pred_region
      %s16 = ssub.s32 6144, 6144
      %17 = vsyncadd [#allocation5], %s16
      %s18 = sshll.u32 [#allocation4], 4
      %s19 = int_to_ptr.vmem [resolvable:$true] %s18
      %24 = dma.hbm_to_vmem [thread:$0]  %s2, 6144, %s19, [#allocation5], 128, 128, 8
    $region9: #{_forward_padded.1} parent=1 // pred_fallthru
      _
    // Predicated region
    $region10: #{_forward_padded.1} parent=1 // pred_check
      _
    $region11: #{_forward_padded.1} parent=1 // pred_check_branch
      %26 = sbr.rel (0) target = $region13
    $region12: #{_forward_padded.1} parent=1 // pred_region
      _
    $region13: #{_forward_padded.1} parent=1 // pred_fallthru
      _
    // Predicated region
    $region14: #{_forward_padded.1} parent=1 // pred_check
      _
    $region15: #{_forward_padded.1} parent=1 // pred_check_branch
      %28 = sbr.rel (0) target = $region17
    $region16: #{_forward_padded.1} parent=1 // pred_region
      %29 = dma.done [#allocation5], 6144
    $region17: #{_forward_padded.1} parent=1 // pred_fallthru
      _
    %v30 = vld [vmem:[%s1] sm:$0xff]
    %v31 = vld [vmem:[#allocation4] sm:$0xff]
    %v32 = vld [vmem:[#allocation4 + $0x8] sm:$0xff]
    %v33 = vld [vmem:[#allocation4 + $0x10] sm:$0xff]
    %v34 = vld [vmem:[#allocation4 + $0x18] sm:$0xff]
    %v35 = vld [vmem:[#allocation4 + $0x20] sm:$0xff]
    %v36 = vld [vmem:[#allocation4 + $0x28] sm:$0xff]
    %v37 = vld [vmem:[#allocation4 + $0x30] sm:$0xff]
    %v38 = vld [vmem:[#allocation4 + $0x38] sm:$0xff]
    %v39 = vld [vmem:[#allocation4 + $0x40] sm:$0xff]
    %v40 = vld [vmem:[#allocation4 + $0x48] sm:$0xff]
    %v41 = vld [vmem:[#allocation4 + $0x50] sm:$0xff]
    %v42 = vld [vmem:[#allocation4 + $0x58] sm:$0xff]
    %v43 = vld [vmem:[#allocation4 + $0x60] sm:$0xff]
    %v44 = vld [vmem:[#allocation4 + $0x68] sm:$0xff]
    %v45 = vld [vmem:[#allocation4 + $0x70] sm:$0xff]
    %v46 = vld [vmem:[#allocation4 + $0x78] sm:$0xff]
    %v47 = vld [vmem:[%s3] sm:$0x1]
    %v48 = vlaneseq
    %v49 = vshrl.u32 %v48, 7
    %v50 = vsub.s32 0, %v49
    %v51 = vrot.slane %v47, %v50
    %52 = vmatprep.subr.mxu0 0.0
    %53 = vmatpush1.msra.mxu0 %v31
    %54 = vmatprep.subr.mxu0 0.0
    %55 = vmatpush1.msra.mxu0 %v32
    %56 = vmatprep.subr.mxu0 0.0
    %57 = vmatpush1.msra.mxu0 %v33
    %58 = vmatprep.subr.mxu0 0.0
    %59 = vmatpush1.msra.mxu0 %v34
    %60 = vmatprep.subr.mxu0 0.0
    %61 = vmatpush1.msra.mxu0 %v35
    %62 = vmatprep.subr.mxu0 0.0
    %63 = vmatpush1.msra.mxu0 %v36
    %64 = vmatprep.subr.mxu0 0.0
    %65 = vmatpush1.msra.mxu0 %v37
    %66 = vmatprep.subr.mxu0 0.0
    %67 = vmatpush1.msra.mxu0 %v38
    %68 = vmatprep.subr.mxu0 0.0
    %69 = vmatpush1.msra.mxu0 %v39
    %70 = vmatprep.subr.mxu0 0.0
    %71 = vmatpush1.msra.mxu0 %v40
    %72 = vmatprep.subr.mxu0 0.0
    %73 = vmatpush1.msra.mxu0 %v41
    %74 = vmatprep.subr.mxu0 0.0
    %75 = vmatpush1.msra.mxu0 %v42
    %76 = vmatprep.subr.mxu0 0.0
    %77 = vmatpush1.msra.mxu0 %v43
    %78 = vmatprep.subr.mxu0 0.0
    %79 = vmatpush1.msra.mxu0 %v44
    %80 = vmatprep.subr.mxu0 0.0
    %81 = vmatpush1.msra.mxu0 %v45
    %82 = vmatprep.subr.mxu0 0.0
    %83 = vmatpush1.msra.mxu0 %v46
    %84 = vmatprep.subr.mxu0 0.0
    %85 = vmatpush1.msra.mxu0 0.0
    %86 = vmatprep.subr.mxu0 0.0
    %87 = vmatpush1.msra.mxu0 0.0
    %88 = vmatprep.subr.mxu0 0.0
    %89 = vmatpush1.msra.mxu0 0.0
    %90 = vmatprep.subr.mxu0 0.0
    %91 = vmatpush1.msra.mxu0 0.0
    %92 = vmatprep.subr.mxu0 0.0
    %93 = vmatpush1.msra.mxu0 0.0
    %94 = vmatprep.subr.mxu0 0.0
    %95 = vmatpush1.msra.mxu0 0.0
    %96 = vmatprep.subr.mxu0 0.0
    %97 = vmatpush1.msra.mxu0 0.0
    %98 = vmatprep.subr.mxu0 0.0
    %99 = vmatpush1.msra.mxu0 0.0
    %100 = vmatprep.subr.mxu0 0.0
    %101 = vmatpush1.msra.mxu0 0.0
    %102 = vmatprep.subr.mxu0 0.0
    %103 = vmatpush1.msra.mxu0 0.0
    %104 = vmatprep.subr.mxu0 0.0
    %105 = vmatpush1.msra.mxu0 0.0
    %106 = vmatprep.subr.mxu0 0.0
    %107 = vmatpush1.msra.mxu0 0.0
    %108 = vmatprep.subr.mxu0 0.0
    %109 = vmatpush1.msra.mxu0 0.0
    %110 = vmatprep.subr.mxu0 0.0
    %111 = vmatpush1.msra.mxu0 0.0
    %112 = vmatprep.subr.mxu0 0.0
    %113 = vmatpush1.msra.mxu0 0.0
    %114 = vmatprep.subr.mxu0 0.0
    %115 = vmatpush1.msra.mxu0 0.0
    %116 = vmatprep.mubr.f32.mxu0 0.0
    %117 = vmatmul.mubr.f32.gmra.mrb[0].mxu0 %v30
    %v118 = vpop.f32.mrb[0].mxu0
    %v119 = vadd.f32 %v51, %v118
    %v120 = vpop.f32.mrb[0].mxu0
    %121 = vdwg.mxu0
    %v122 = vtanh.pop %v119
    %s123 = scalar_lea.vmem [#allocation4], 128
    %v124 = vld [vmem:[%s123] sm:$0xff]
    %v125 = vld [vmem:[%s123 + $0x8] sm:$0xff]
    %v126 = vld [vmem:[%s123 + $0x10] sm:$0xff]
    %v127 = vld [vmem:[%s123 + $0x18] sm:$0xff]
    %v128 = vld [vmem:[%s123 + $0x20] sm:$0xff]
    %v129 = vld [vmem:[%s123 + $0x28] sm:$0xff]
    %v130 = vld [vmem:[%s123 + $0x30] sm:$0xff]
    %v131 = vld [vmem:[%s123 + $0x38] sm:$0xff]
    %v132 = vld [vmem:[%s123 + $0x40] sm:$0xff]
    %v133 = vld [vmem:[%s123 + $0x48] sm:$0xff]
    %v134 = vld [vmem:[%s123 + $0x50] sm:$0xff]
    %v135 = vld [vmem:[%s123 + $0x58] sm:$0xff]
    %v136 = vld [vmem:[%s123 + $0x60] sm:$0xff]
    %v137 = vld [vmem:[%s123 + $0x68] sm:$0xff]
    %v138 = vld [vmem:[%s123 + $0x70] sm:$0xff]
    %v139 = vld [vmem:[%s123 + $0x78] sm:$0xff]
    %v140 = vld [vmem:[%s3 + $0x1] sm:$0x1]
    %v141 = vlaneseq
    %v142 = vshrl.u32 %v141, 7
    %v143 = vsub.s32 0, %v142
    %v144 = vrot.slane %v140, %v143
    %145 = vmatprep.subr.mxu0 0.0
    %146 = vmatpush1.msra.mxu0 %v124
    %147 = vmatprep.subr.mxu0 0.0
    %148 = vmatpush1.msra.mxu0 %v125
    %149 = vmatprep.subr.mxu0 0.0
    %150 = vmatpush1.msra.mxu0 %v126
    %151 = vmatprep.subr.mxu0 0.0
    %152 = vmatpush1.msra.mxu0 %v127
    %153 = vmatprep.subr.mxu0 0.0
    %154 = vmatpush1.msra.mxu0 %v128
    %155 = vmatprep.subr.mxu0 0.0
    %156 = vmatpush1.msra.mxu0 %v129
    %157 = vmatprep.subr.mxu0 0.0
    %158 = vmatpush1.msra.mxu0 %v130
    %159 = vmatprep.subr.mxu0 0.0
    %160 = vmatpush1.msra.mxu0 %v131
    %161 = vmatprep.subr.mxu0 0.0
    %162 = vmatpush1.msra.mxu0 %v132
    %163 = vmatprep.subr.mxu0 0.0
    %164 = vmatpush1.msra.mxu0 %v133
    %165 = vmatprep.subr.mxu0 0.0
    %166 = vmatpush1.msra.mxu0 %v134
    %167 = vmatprep.subr.mxu0 0.0
    %168 = vmatpush1.msra.mxu0 %v135
    %169 = vmatprep.subr.mxu0 0.0
    %170 = vmatpush1.msra.mxu0 %v136
    %171 = vmatprep.subr.mxu0 0.0
    %172 = vmatpush1.msra.mxu0 %v137
    %173 = vmatprep.subr.mxu0 0.0
    %174 = vmatpush1.msra.mxu0 %v138
    %175 = vmatprep.subr.mxu0 0.0
    %176 = vmatpush1.msra.mxu0 %v139
    %177 = vmatprep.subr.mxu0 0.0
    %178 = vmatpush1.msra.mxu0 0.0
    %179 = vmatprep.subr.mxu0 0.0
    %180 = vmatpush1.msra.mxu0 0.0
    %181 = vmatprep.subr.mxu0 0.0
    %182 = vmatpush1.msra.mxu0 0.0
    %183 = vmatprep.subr.mxu0 0.0
    %184 = vmatpush1.msra.mxu0 0.0
    %185 = vmatprep.subr.mxu0 0.0
    %186 = vmatpush1.msra.mxu0 0.0
    %187 = vmatprep.subr.mxu0 0.0
    %188 = vmatpush1.msra.mxu0 0.0
    %189 = vmatprep.subr.mxu0 0.0
    %190 = vmatpush1.msra.mxu0 0.0
    %191 = vmatprep.subr.mxu0 0.0
    %192 = vmatpush1.msra.mxu0 0.0
    %193 = vmatprep.subr.mxu0 0.0
    %194 = vmatpush1.msra.mxu0 0.0
    %195 = vmatprep.subr.mxu0 0.0
    %196 = vmatpush1.msra.mxu0 0.0
    %197 = vmatprep.subr.mxu0 0.0
    %198 = vmatpush1.msra.mxu0 0.0
    %199 = vmatprep.subr.mxu0 0.0
    %200 = vmatpush1.msra.mxu0 0.0
    %201 = vmatprep.subr.mxu0 0.0
    %202 = vmatpush1.msra.mxu0 0.0
    %203 = vmatprep.subr.mxu0 0.0
    %204 = vmatpush1.msra.mxu0 0.0
    %205 = vmatprep.subr.mxu0 0.0
    %206 = vmatpush1.msra.mxu0 0.0
    %207 = vmatprep.subr.mxu0 0.0
    %208 = vmatpush1.msra.mxu0 0.0
    %209 = vmatprep.mubr.f32.mxu0 0.0
    %210 = vmatmul.mubr.f32.gmra.mrb[0].mxu0 %v122
    %v211 = vpop.f32.mrb[0].mxu0
    %v212 = vadd.f32 %v144, %v211
    %v213 = vpop.f32.mrb[0].mxu0
    %214 = vdwg.mxu0
    %v215 = vtanh.pop %v212
    %s216 = scalar_lea.vmem [#allocation4], 256
    %v217 = vld [vmem:[%s216] sm:$0xff]
    %v218 = vld [vmem:[%s216 + $0x8] sm:$0xff]
    %v219 = vld [vmem:[%s216 + $0x10] sm:$0xff]
    %v220 = vld [vmem:[%s216 + $0x18] sm:$0xff]
    %v221 = vld [vmem:[%s216 + $0x20] sm:$0xff]
    %v222 = vld [vmem:[%s216 + $0x28] sm:$0xff]
    %v223 = vld [vmem:[%s216 + $0x30] sm:$0xff]
    %v224 = vld [vmem:[%s216 + $0x38] sm:$0xff]
    %v225 = vld [vmem:[%s216 + $0x40] sm:$0xff]
    %v226 = vld [vmem:[%s216 + $0x48] sm:$0xff]
    %v227 = vld [vmem:[%s216 + $0x50] sm:$0xff]
    %v228 = vld [vmem:[%s216 + $0x58] sm:$0xff]
    %v229 = vld [vmem:[%s216 + $0x60] sm:$0xff]
    %v230 = vld [vmem:[%s216 + $0x68] sm:$0xff]
    %v231 = vld [vmem:[%s216 + $0x70] sm:$0xff]
    %v232 = vld [vmem:[%s216 + $0x78] sm:$0xff]
    %v233 = vld [vmem:[%s3 + $0x2] sm:$0x1]
    %v234 = vlaneseq
    %v235 = vshrl.u32 %v234, 7
    %v236 = vsub.s32 0, %v235
    %v237 = vrot.slane %v233, %v236
    %238 = vmatprep.subr.mxu0 0.0
    %239 = vmatpush1.msra.mxu0 %v217
    %240 = vmatprep.subr.mxu0 0.0
    %241 = vmatpush1.msra.mxu0 %v218
    %242 = vmatprep.subr.mxu0 0.0
    %243 = vmatpush1.msra.mxu0 %v219
    %244 = vmatprep.subr.mxu0 0.0
    %245 = vmatpush1.msra.mxu0 %v220
    %246 = vmatprep.subr.mxu0 0.0
    %247 = vmatpush1.msra.mxu0 %v221
    %248 = vmatprep.subr.mxu0 0.0
    %249 = vmatpush1.msra.mxu0 %v222
    %250 = vmatprep.subr.mxu0 0.0
    %251 = vmatpush1.msra.mxu0 %v223
    %252 = vmatprep.subr.mxu0 0.0
    %253 = vmatpush1.msra.mxu0 %v224
    %254 = vmatprep.subr.mxu0 0.0
    %255 = vmatpush1.msra.mxu0 %v225
    %256 = vmatprep.subr.mxu0 0.0
    %257 = vmatpush1.msra.mxu0 %v226
    %258 = vmatprep.subr.mxu0 0.0
    %259 = vmatpush1.msra.mxu0 %v227
    %260 = vmatprep.subr.mxu0 0.0
    %261 = vmatpush1.msra.mxu0 %v228
    %262 = vmatprep.subr.mxu0 0.0
    %263 = vmatpush1.msra.mxu0 %v229
    %264 = vmatprep.subr.mxu0 0.0
    %265 = vmatpush1.msra.mxu0 %v230
    %266 = vmatprep.subr.mxu0 0.0
    %267 = vmatpush1.msra.mxu0 %v231
    %268 = vmatprep.subr.mxu0 0.0
    %269 = vmatpush1.msra.mxu0 %v232
    %270 = vmatprep.subr.mxu0 0.0
    %271 = vmatpush1.msra.mxu0 0.0
    %272 = vmatprep.subr.mxu0 0.0
    %273 = vmatpush1.msra.mxu0 0.0
    %274 = vmatprep.subr.mxu0 0.0
    %275 = vmatpush1.msra.mxu0 0.0
    %276 = vmatprep.subr.mxu0 0.0
    %277 = vmatpush1.msra.mxu0 0.0
    %278 = vmatprep.subr.mxu0 0.0
    %279 = vmatpush1.msra.mxu0 0.0
    %280 = vmatprep.subr.mxu0 0.0
    %281 = vmatpush1.msra.mxu0 0.0
    %282 = vmatprep.subr.mxu0 0.0
    %283 = vmatpush1.msra.mxu0 0.0
    %284 = vmatprep.subr.mxu0 0.0
    %285 = vmatpush1.msra.mxu0 0.0
    %286 = vmatprep.subr.mxu0 0.0
    %287 = vmatpush1.msra.mxu0 0.0
    %288 = vmatprep.subr.mxu0 0.0
    %289 = vmatpush1.msra.mxu0 0.0
    %290 = vmatprep.subr.mxu0 0.0
    %291 = vmatpush1.msra.mxu0 0.0
    %292 = vmatprep.subr.mxu0 0.0
    %293 = vmatpush1.msra.mxu0 0.0
    %294 = vmatprep.subr.mxu0 0.0
    %295 = vmatpush1.msra.mxu0 0.0
    %296 = vmatprep.subr.mxu0 0.0
    %297 = vmatpush1.msra.mxu0 0.0
    %298 = vmatprep.subr.mxu0 0.0
    %299 = vmatpush1.msra.mxu0 0.0
    %300 = vmatprep.subr.mxu0 0.0
    %301 = vmatpush1.msra.mxu0 0.0
    %302 = vmatprep.mubr.f32.mxu0 0.0
    %303 = vmatmul.mubr.f32.gmra.mrb[0].mxu0 %v215
    %v304 = vpop.f32.mrb[0].mxu0
    %v305 = vadd.f32 %v237, %v304
    %v306 = vpop.f32.mrb[0].mxu0
    %307 = vdwg.mxu0
    %s308 = sld [smem:[#allocation3]]
    %p309 = scmp.eq.s32.totalorder %s308, 0
    // Predicated region
    $region18: #{_forward_padded.1} parent=1 // pred_check
      %p310 = pneg %p309
    $region19: #{_forward_padded.1} parent=1 // pred_check_branch
      %312 = sbr.rel (%p310) target = $region21
    $region20: #{_forward_padded.1} parent=1 // pred_region
      %313 = vst [vmem:[%s4] sm:$0xff] %v305
    $region21: #{_forward_padded.1} parent=1 // pred_fallthru
      _
    %s314 = sld [smem:[#allocation3]]
    %p315 = scmp.ne.s32.totalorder %s314, 0
    // Predicated region
    $region22: #{_forward_padded.1} parent=1 // pred_check
      %p316 = pneg %p315
    $region23: #{_forward_padded.1} parent=1 // pred_check_branch
      %318 = sbr.rel (%p316) target = $region25
    $region24: #{_forward_padded.1} parent=1 // pred_region
      %v319 = vld [vmem:[%s1 + $0x8] sm:$0xff]
      %v320 = vld [vmem:[%s3 + $0x3] sm:$0x1]
      %v321 = vld [vmem:[%s3 + $0x4] sm:$0x1]
      %v322 = vsub.f32 %v319, %v305
      %v323 = vsub.f32 0.0, %v320
      %v324 = vmul.f32 %v323, 1.442695
      %v325 = vpow.pop %v324
      %v326 = vlaneseq
      %v327 = vshrl.u32 %v326, 7
      %v328 = vsub.s32 0, %v327
      %v329 = vrot.slane %v325, %v328
      %v330 = vmul.f32 %v322, %v329
      %v331 = vmul.f32 %v330, -0.5
      %v332 = vmul.f32 %v331, %v330
      %v333 = vlaneseq
      %v334 = vshrl.u32 %v333, 7
      %v335 = vsub.s32 0, %v334
      %v336 = vrot.slane %v320, %v335
      %v337 = vsub.f32 %v332, %v336
      %v338 = vsub.f32 %v337, 0.9189385
      %v339 = vlaneseq
      %v340 = vshrl.u32 %v339, 7
      %v341 = vsub.s32 0, %v340
      %v342 = vrot.slane %v321, %v341
      %v343 = vmul.f32 %v338, %v342
      %344 = vadd.xlane.f32.xlu0 %v343
      %v345 = vpop.xlane.xlu0 %344
      %v346 = vlaneseq
      %v347 = vand.u32 %v346, 127
      %vm348 = vcmp.eq.s32.totalorder %v347, 127
      %v349 = vsel %vm348, %v345, %v305
      %350 = vst [vmem:[%s4] sm:$0xff] %v349
    $region25: #{_forward_padded.1} parent=1 // pred_fallthru
      _
    // Predicated region
    $region26: #{_forward_padded.1} parent=1 // pred_check
      _
    $region27: #{_forward_padded.1} parent=1 // pred_check_branch
      %352 = sbr.rel (0) target = $region29
    $region28: #{_forward_padded.1} parent=1 // pred_region
      _
    $region29: #{_forward_padded.1} parent=1 // pred_fallthru
      _
    // Predicated region
    $region30: #{_forward_padded.1} parent=1 // pred_check
      _
    $region31: #{_forward_padded.1} parent=1 // pred_check_branch
      %354 = sbr.rel (0) target = $region33
    $region32: #{_forward_padded.1} parent=1 // pred_region
      _
    $region33: #{_forward_padded.1} parent=1 // pred_fallthru
      _
    %355 = vsyncpa [#allocation5], 1

</llo_original>
